<compile_context>
chip_gen: v5e
topology: v5e:2x2
jax: 0.10.0
libtpu: 0.0.40
codegen_flags: <defaults>
</compile_context>

<pallas_src>
import math

import jax
import jax.numpy as jnp
from jax.experimental import pallas as pl
from jax.experimental.pallas import tpu as pltpu


def _build_pe_table(dim_model: int, max_len: int) -> jnp.ndarray:
    """Deterministic sinusoidal table, identical math to the PyTorch __init__.

    Returns shape (max_len + 2, dim_model), float32.  (Handles odd dim_model
    gracefully by truncating the cos half; even dim_model matches PyTorch
    exactly.)
    """
    length = max_len + 2
    pos = jnp.arange(0, length, dtype=jnp.float32)[:, None]            # (L, 1)
    div_term = jnp.exp(
        jnp.arange(0, dim_model, 2, dtype=jnp.float32)
        * (-math.log(10000.0) / dim_model)
    )                                                                   # (ceil(D/2),)
    angles = pos * div_term                                             # (L, ceil(D/2))
    pe = jnp.zeros((length, dim_model), dtype=jnp.float32)
    pe = pe.at[:, 0::2].set(jnp.sin(angles))
    pe = pe.at[:, 1::2].set(jnp.cos(angles)[:, : dim_model // 2])
    return pe


def _pe_add_kernel(x_ref, pe_ref, o_ref):
    # x_ref / pe_ref / o_ref: (TS, D) tiles (batch dim squeezed out).
    # Compute in f32 (no-op for f32 inputs), cast once on store.
    o_ref[...] = (
        x_ref[...].astype(jnp.float32) + pe_ref[...].astype(jnp.float32)
    ).astype(o_ref.dtype)


def _choose_seq_tile(S: int, D: int, itemsize: int) -> int:
    """Rows per sequence tile.

    Budget: double-buffered x + out (x dtype) and pe (f32) tiles stay under
    ~12 MiB, so they fit every generation's default scoped-VMEM limit (v5e
    16 MiB, v6e/v7x 32 MiB) with headroom.  Cap rows so tiles stay in the
    ~1–4 MiB streaming sweet spot and the pipeline keeps several steps.
    """
    budget_bytes = 12 * 1024 * 1024
    bytes_per_row = D * 2 * (2 * itemsize + 4)  # 2x-buffered (x + out) + pe(f32)
    ts = budget_bytes // max(bytes_per_row, 1)
    ts = min(ts, 4096)                          # keep tiles ~1-4 MiB, decent depth
    ts = max(8, (ts // 8) * 8)                  # sublane-aligned
    if ts >= S:
        return S                                # full-dim block is always legal
    return ts


_MIN_PALLAS_ELEMS = 8 * 128  # below this, per-call overhead exceeds bytes moved


def positional_encoding_forward(x: jnp.ndarray,
                                pe_full: jnp.ndarray,
                                *,
                                force_pallas: bool = False) -> jnp.ndarray:
    """x: (B, S, D); pe_full: (max_len + 2, D) float32.  Returns x + pe[:S]."""
    B, S, D = x.shape
    pe = pe_full[:S, :].astype(jnp.float32)     # static slice of the table

    if not force_pallas and B * S * D < _MIN_PALLAS_ELEMS:
        # Tiny-shape fallback: let XLA fuse the broadcast-add (kernel launch
        # + grid-step overhead would dominate the ~KBs of data moved).
        return (x.astype(jnp.float32) + pe[None, :, :]).astype(x.dtype)

    ts = _choose_seq_tile(S, D, jnp.dtype(x.dtype).itemsize)
    grid = (pl.cdiv(S, ts), B)                  # batch is the minor grid axis

    # TODO(synk): pass input_output_aliases={0: 0} when the caller donates x,
    # to drop the extra HBM output allocation (pure footprint win).
    return pl.pallas_call(
        _pe_add_kernel,
        out_shape=jax.ShapeDtypeStruct((B, S, D), x.dtype),
        grid_spec=pltpu.PrefetchScalarGridSpec(
            num_scalar_prefetch=0,
            grid=grid,
            in_specs=[
                # Batch dim squeezed out of the kernel view; block index (b, s, 0).
                pl.BlockSpec((None, ts, D), lambda s, b: (b, s, 0)),
                # pe tile: index constant along the minor batch axis -> no re-DMA
                # between consecutive grid steps of the same sequence tile.
                pl.BlockSpec((ts, D), lambda s, b: (s, 0)),
            ],
            out_specs=pl.BlockSpec((None, ts, D), lambda s, b: (b, s, 0)),
        ),
        compiler_params=pltpu.CompilerParams(
            dimension_semantics=("parallel", "parallel"),
        ),
    )(x, pe)


if __name__ == "__main__":
    key = jax.random.PRNGKey(0)
    k0, k1, k2 = jax.random.split(key, 3)

    # --- Primary test: small but realistic transformer shape (lane-dense D) ---
    B, S, D = 2, 64, 128
    max_len = 128
    x = jax.random.normal(k0, (B, S, D), dtype=jnp.float32)
    pe_full = _build_pe_table(D, max_len)

    out = jax.block_until_ready(positional_encoding_forward(x, pe_full))
    ref = x + pe_full[None, :S, :]
    assert out.shape == (B, S, D)
    assert jnp.allclose(out, ref, atol=1e-6), "mismatch vs reference (main)"

    # --- Narrow-D shape from the module's example sizes; force the Pallas path
    #     to check correctness when D < 128 (block equals the full dim). ---
    B2, S2, D2 = 2, 8, 32
    max_len2 = 16
    x2 = jax.random.normal(k1, (B2, S2, D2), dtype=jnp.float32)
    pe_full2 = _build_pe_table(D2, max_len2)

    out2 = jax.block_until_ready(
        positional_encoding_forward(x2, pe_full2, force_pallas=True)
    )
    ref2 = x2 + pe_full2[None, :S2, :]
    assert jnp.allclose(out2, ref2, atol=1e-6), "mismatch vs reference (small)"

    # --- Same tiny shape through the XLA fallback dispatch ---
    out3 = jax.block_until_ready(positional_encoding_forward(x2, pe_full2))
    assert jnp.allclose(out3, ref2, atol=1e-6), "mismatch vs reference (fallback)"

    # --- bf16 input: compute in f32, single cast on store ---
    x4 = jax.random.normal(k2, (B, S, D), dtype=jnp.float32).astype(jnp.bfloat16)
    out4 = jax.block_until_ready(positional_encoding_forward(x4, pe_full))
    ref4 = (x4.astype(jnp.float32) + pe_full[None, :S, :]).astype(jnp.bfloat16)
    assert out4.dtype == jnp.bfloat16
    assert jnp.allclose(out4.astype(jnp.float32), ref4.astype(jnp.float32),
                        atol=1e-2), "mismatch vs reference (bf16)"

    print("KERNEL_OK")
</pallas_src>

<mosaic_0001>
module attributes {stable_mosaic.version = 11 : i64} {
  func.func @_pe_add_kernel(%arg0: i32, %arg1: i32, %arg2: memref<1x64x128xf32, #tpu.memory_space<vmem>>, %arg3: memref<64x128xf32, #tpu.memory_space<vmem>>, %arg4: memref<1x64x128xf32, #tpu.memory_space<vmem>>) attributes {dimension_semantics = [#tpu.dimension_semantics<parallel>, #tpu.dimension_semantics<parallel>], iteration_bounds = array<i64: 1, 2>, scalar_prefetch = 0 : i64, scratch_operands = 0 : i64, tpu.core_type = #tpu.core_type<tc>, window_params = [{transform_indices = @transform_0, window_bounds = array<i64: 1, 64, 128>}, {transform_indices = @transform_1, window_bounds = array<i64: 64, 128>}, {transform_indices = @transform_2, window_bounds = array<i64: 1, 64, 128>}]} {
    %c0 = arith.constant 0 : index
    %c0_0 = arith.constant 0 : index
    %c0_1 = arith.constant 0 : index
    %0 = vector.load %arg2[%c0, %c0_0, %c0_1] : memref<1x64x128xf32, #tpu.memory_space<vmem>>, vector<1x64x128xf32>
    %1 = vector.shape_cast %0 : vector<1x64x128xf32> to vector<64x128xf32>
    %c0_2 = arith.constant 0 : index
    %c0_3 = arith.constant 0 : index
    %2 = vector.load %arg3[%c0_2, %c0_3] : memref<64x128xf32, #tpu.memory_space<vmem>>, vector<64x128xf32>
    %3 = arith.addf %1, %2 : vector<64x128xf32>
    %c0_4 = arith.constant 0 : index
    %c0_5 = arith.constant 0 : index
    %c0_6 = arith.constant 0 : index
    %4 = vector.load %arg4[%c0_4, %c0_5, %c0_6] : memref<1x64x128xf32, #tpu.memory_space<vmem>>, vector<1x64x128xf32>
    %5 = vector.shape_cast %4 : vector<1x64x128xf32> to vector<64x128xf32>
    %6 = vector.shape_cast %3 : vector<64x128xf32> to vector<1x64x128xf32>
    tpu.vector_store %arg4[%c0_4, %c0_5, %c0_6], %6 {strides = array<i32>} : memref<1x64x128xf32, #tpu.memory_space<vmem>>, vector<1x64x128xf32>,
    return
  }
  func.func @transform_0(%arg0: i32, %arg1: i32) -> (i32, i32, i32) {
    %c0_i32 = arith.constant 0 : i32
    %c0_i32_0 = arith.constant 0 : i32
    return %arg1, %arg0, %c0_i32 : i32, i32, i32
  }
  func.func @transform_1(%arg0: i32, %arg1: i32) -> (i32, i32) {
    %c0_i32 = arith.constant 0 : i32
    %c0_i32_0 = arith.constant 0 : i32
    return %arg0, %c0_i32 : i32, i32
  }
  func.func @transform_2(%arg0: i32, %arg1: i32) -> (i32, i32, i32) {
    %c0_i32 = arith.constant 0 : i32
    %c0_i32_0 = arith.constant 0 : i32
    return %arg1, %arg0, %c0_i32 : i32, i32, i32
  }
}

</mosaic_0001>

<llo_original>
// kernel: tpu_custom_call.1
$region0: #{tpu_custom_call.1}
  #allocation0 [shape = 'u32[]', space=smem, size = 0x4, offset = 0x4, fixed_abs, tag = 'smem constant byte address 0x4 - core index']
  #allocation1 [shape = 'u32[72,128]{1,0:T(1,128)}', space=vmem, size = 0x9000, scoped, tag = 'internal scratch']
  %s0 = inlined_call_operand.hbm [shape: f32[2,64,128], index: 0, kind: input, shape index: {}]
  %s1 = inlined_call_operand.hbm [shape: f32[64,128], index: 1, kind: input, shape index: {}]
  %s2 = inlined_call_operand.hbm [shape: f32[2,64,128], index: 2, kind: output, shape index: {}]
  %s3 = sld [smem:[#allocation0]]
  $region49: #{tpu_custom_call.1} parent=0
    _
  %s5 = ssub.s32 1, %s3
  %s6 = scalar_select 0, %s5, %s3
  $region1: #{tpu_custom_call.1} parent=0
    #allocation2 [shape = 'u8[65536]{0}', space=vmem, size = 0x10000, scoped, tag = 'input window, operand 0']
    #allocation3 [shape = 's32[2]{0}', space=sflag, size = 0x8, scoped, tag = 'scoped memory for tpu_custom_call.1']
    #allocation4 [shape = 's32[2]{0}', space=sflag, size = 0x8, scoped, tag = 'scoped memory for tpu_custom_call.1']
    #allocation5 [shape = 'u8[32768]{0}', space=vmem, size = 0x8000, scoped, tag = 'input window, operand 1, single buffered']
    #allocation6 [shape = 's32[1]{0}', space=sflag, size = 0x4, scoped, tag = 'scoped memory for tpu_custom_call.1']
    #allocation7 [shape = 'u8[65536]{0}', space=vmem, size = 0x10000, scoped, tag = 'output window, operand 0']
    %7 = vsyncpa [#allocation3], 0
    %s8 = scalar_lea.sflag [#allocation3], 1
    %9 = vsyncpa %s8, 0
    %10 = vsyncpa [#allocation6], 0
    %11 = vsyncpa [#allocation4], 0
    %s12 = scalar_lea.sflag [#allocation4], 1
    %13 = vsyncpa %s12, 0
    loop: start=0, step=1, limit=4
    $region2: #{tpu_custom_call.1} parent=1 // loop_pre_header
      _
    $region3: #{tpu_custom_call.1} parent=1 // loop_header
      %s15 = sphi 0, %s19
      %p16 = scmp.ge.s32.totalorder %s15, 4
      %s22 = sphi 0, %s34
      %s23 = sphi 0, %s30
      %s24 = sphi 0, %s22
      %s25 = sphi 0, %s23
      %s26 = sphi 0, %s24
      %s27 = sphi 0, %s25
      %s39 = sphi 0, %s41
      %s42 = sphi 0, %s39
      %s43 = sphi 0, %s42
      %s59 = sphi 0, %s43
      %s65 = sphi 0, %s67
      %s68 = sphi 0, %s65
      %s69 = sphi 0, %s68
      %s85 = sphi 0, %s69
      %s93 = sphi 0, %s95
      %s96 = sphi 0, %s93
      %s97 = sphi 0, %s96
      %s113 = sphi 0, %s97
    $region4: #{tpu_custom_call.1} parent=1 // loop_header_branch
      %18 = sbr.rel (%p16) target = $region8
    $region5: #{tpu_custom_call.1} parent=1 // loop_body
      %s20 = ssub.s32 %s15, 1
      %s21 = ssub.s32 %s15, 2
      %s28 = sadd.s32 1, %s23
      %p29 = scmp.ge.s32.totalorder %s28, 2
      %s30 = scalar_select %p29, 0, %s28
      %s31 = sadd.s32 1, %s22
      %s32 = scalar_select %p29, %s31, %s22
      %p33 = scmp.ge.s32.totalorder %s32, 1
      %s34 = scalar_select %p33, 0, %s32
      %s35 = ssub.s32 %s23, %s30
      %s36 = ssub.s32 %s22, %s34
      %s37 = sor.u32 %s35, %s36
      %p38 = scmp.eq.s32.totalorder %s37, 0
      %s40 = sadd.s32 %s39, 1
      %s41 = scalar_select %p38, %s39, %s40
      %p44 = pneg %p38
      %p45 = scmp.eq.s32.totalorder %s15, 1
      %p46 = por %p44, %p45
      %p47 = scmp.ne.s32.totalorder %s39, %s42
      %p48 = scmp.eq.s32.totalorder %s15, 0
      %p49 = por %p47, %p48
      %p50 = scmp.ne.s32.totalorder %s39, %s42
      %p51 = scmp.eq.s32.totalorder %s20, 1
      %p52 = por %p50, %p51
      %p53 = scmp.ne.s32.totalorder %s42, %s43
      %p54 = scmp.eq.s32.totalorder %s20, 0
      %p55 = por %p53, %p54
      %p56 = scmp.ne.s32.totalorder %s42, %s43
      %p57 = scmp.eq.s32.totalorder %s21, 1
      %p58 = por %p56, %p57
      %p60 = scmp.ne.s32.totalorder %s43, %s59
      %p61 = scmp.eq.s32.totalorder %s21, 0
      %p62 = por %p60, %p61
      %s63 = ssub.s32 %s22, %s34
      %p64 = scmp.eq.s32.totalorder %s63, 0
      %s66 = sadd.s32 %s65, 1
      %s67 = scalar_select %p64, %s65, %s66
      %p70 = pneg %p64
      %p71 = scmp.eq.s32.totalorder %s15, 1
      %p72 = por %p70, %p71
      %p73 = scmp.ne.s32.totalorder %s65, %s68
      %p74 = scmp.eq.s32.totalorder %s15, 0
      %p75 = por %p73, %p74
      %p76 = scmp.ne.s32.totalorder %s65, %s68
      %p77 = scmp.eq.s32.totalorder %s20, 1
      %p78 = por %p76, %p77
      %p79 = scmp.ne.s32.totalorder %s68, %s69
      %p80 = scmp.eq.s32.totalorder %s20, 0
      %p81 = por %p79, %p80
      %p82 = scmp.ne.s32.totalorder %s68, %s69
      %p83 = scmp.eq.s32.totalorder %s21, 1
      %p84 = por %p82, %p83
      %p86 = scmp.ne.s32.totalorder %s69, %s85
      %p87 = scmp.eq.s32.totalorder %s21, 0
      %p88 = por %p86, %p87
      %s89 = ssub.s32 %s23, %s30
      %s90 = ssub.s32 %s22, %s34
      %s91 = sor.u32 %s89, %s90
      %p92 = scmp.eq.s32.totalorder %s91, 0
      %s94 = sadd.s32 %s93, 1
      %s95 = scalar_select %p92, %s93, %s94
      %p98 = pneg %p92
      %p99 = scmp.eq.s32.totalorder %s15, 1
      %p100 = por %p98, %p99
      %p101 = scmp.ne.s32.totalorder %s93, %s96
      %p102 = scmp.eq.s32.totalorder %s15, 0
      %p103 = por %p101, %p102
      %p104 = scmp.ne.s32.totalorder %s93, %s96
      %p105 = scmp.eq.s32.totalorder %s20, 1
      %p106 = por %p104, %p105
      %p107 = scmp.ne.s32.totalorder %s96, %s97
      %p108 = scmp.eq.s32.totalorder %s20, 0
      %p109 = por %p107, %p108
      %p110 = scmp.ne.s32.totalorder %s96, %s97
      %p111 = scmp.eq.s32.totalorder %s21, 1
      %p112 = por %p110, %p111
      %p114 = scmp.ne.s32.totalorder %s97, %s113
      %p115 = scmp.eq.s32.totalorder %s21, 0
      %p116 = por %p114, %p115
      %p117 = scmp.le.s32.totalorder 1, %s15
      %p118 = scmp.lt.s32.totalorder %s15, 3
      %p119 = pnand %p117, %p118
      %p120 = pneg %p119
      // Predicated region
      $region9: #{tpu_custom_call.1} parent=5 // pred_check
        _
      $region10: #{tpu_custom_call.1} parent=5 // pred_check_branch
        %122 = sbr.rel (%p119) target = $region12
      $region11: #{tpu_custom_call.1} parent=5 // pred_region
        %s123 = ssub.s32 %s15, 1
        // Predicated region
        $region13: #{tpu_custom_call.1} parent=11 // pred_check
          %p124 = pneg %p81
        $region14: #{tpu_custom_call.1} parent=11 // pred_check_branch
          %126 = sbr.rel (%p124) target = $region16
        $region15: #{tpu_custom_call.1} parent=11 // pred_region
          %s127 = smul.u32 8, %s24
          %129 = vsyncadd [#allocation6], 0
          %s130 = smul.addr %s127, 8
          %s131 = scalar_lea.hbm %s1, %s130
          %s132 = sshll.u32 %s131, 4
          %s133 = int_to_ptr.hbm [resolvable:$true] %s132
          %s134 = sshll.u32 [#allocation5], 4
          %s135 = int_to_ptr.vmem [resolvable:$true] %s134
          %140 = dma.hbm_to_vmem [thread:$0]  %s133, 1024, %s135, [#allocation6], 128, 128, 8
        $region16: #{tpu_custom_call.1} parent=11 // pred_fallthru
          _
      $region12: #{tpu_custom_call.1} parent=5 // pred_fallthru
        _
      %p141 = scmp.lt.s32.totalorder %s15, 2
      // Predicated region
      $region17: #{tpu_custom_call.1} parent=5 // pred_check
        %p142 = pneg %p141
      $region18: #{tpu_custom_call.1} parent=5 // pred_check_branch
        %144 = sbr.rel (%p142) target = $region20
      $region19: #{tpu_custom_call.1} parent=5 // pred_region
        // Predicated region
        $region21: #{tpu_custom_call.1} parent=19 // pred_check
          %p145 = pneg %p49
        $region22: #{tpu_custom_call.1} parent=19 // pred_check_branch
          %147 = sbr.rel (%p145) target = $region24
        $region23: #{tpu_custom_call.1} parent=19 // pred_region
          %s148 = sand.u32 %s39, 1
          %s149 = scalar_lea.sflag [#allocation3], %s148
          %s150 = sand.u32 %s39, 1
          %s151 = smul.addr %s150, 64
          %s152 = scalar_lea.vmem [#allocation2], %s151
          %s153 = smul.u32 8, %s22
          %155 = vsyncadd %s149, 0
          %s156 = smul.addr %s23, 8
          %s157 = sadd.s32 %s153, %s156
          %s158 = smul.addr %s157, 8
          %s159 = scalar_lea.hbm %s0, %s158
          %s160 = sshll.u32 %s159, 4
          %s161 = int_to_ptr.hbm [resolvable:$true] %s160
          %s162 = sshll.u32 %s152, 4
          %s163 = int_to_ptr.vmem [resolvable:$true] %s162
          %168 = dma.hbm_to_vmem [thread:$0]  %s161, 1024, %s163, %s149, 128, 128, 8
        $region24: #{tpu_custom_call.1} parent=19 // pred_fallthru
          _
      $region20: #{tpu_custom_call.1} parent=5 // pred_fallthru
        _
      %p169 = scmp.le.s32.totalorder 1, %s15
      %p170 = scmp.lt.s32.totalorder %s15, 3
      %p171 = pnand %p169, %p170
      %p172 = pneg %p171
      // Predicated region
      $region25: #{tpu_custom_call.1} parent=5 // pred_check
        _
      $region26: #{tpu_custom_call.1} parent=5 // pred_check_branch
        %174 = sbr.rel (%p171) target = $region28
      $region27: #{tpu_custom_call.1} parent=5 // pred_region
        %s175 = ssub.s32 %s15, 1
        %s176 = sand.u32 %s42, 1
        %s177 = scalar_lea.sflag [#allocation3], %s176
        %s178 = sand.u32 %s42, 1
        %s179 = smul.addr %s178, 64
        %s180 = scalar_lea.vmem [#allocation2], %s179
        // Predicated region
        $region29: #{tpu_custom_call.1} parent=27 // pred_check
          %p181 = pneg %p55
        $region30: #{tpu_custom_call.1} parent=27 // pred_check_branch
          %183 = sbr.rel (%p181) target = $region32
        $region31: #{tpu_custom_call.1} parent=27 // pred_region
          %185 = dma.done %s177, 1024
        $region32: #{tpu_custom_call.1} parent=27 // pred_fallthru
          _
        // Predicated region
        $region33: #{tpu_custom_call.1} parent=27 // pred_check
          %p186 = pneg %p81
        $region34: #{tpu_custom_call.1} parent=27 // pred_check_branch
          %188 = sbr.rel (%p186) target = $region36
        $region35: #{tpu_custom_call.1} parent=27 // pred_region
          %190 = dma.done [#allocation6], 1024
        $region36: #{tpu_custom_call.1} parent=27 // pred_fallthru
          _
        %s191 = sand.u32 %s42, 1
        %s192 = scalar_lea.sflag [#allocation3], %s191
        %s193 = sand.u32 %s42, 1
        %s194 = smul.addr %s193, 64
        %s195 = scalar_lea.vmem [#allocation2], %s194
        %p196 = pneg %p55
        %p197 = pneg %p52
        %p198 = pneg %p81
        %p199 = pneg %p78
        %p200 = pneg %p109
        %p201 = pneg %p106
        %s202 = sand.u32 %s96, 1
        %s203 = scalar_lea.sflag [#allocation4], %s202
        %s204 = sand.u32 %s96, 1
        %s205 = smul.addr %s204, 64
        %s206 = scalar_lea.vmem [#allocation7], %s205
        %s207 = smul.u32 8, %s24
        %s208 = smul.u32 8, %s24
        %s209 = smul.u32 8, %s24
        %v210 = vld [vmem:[%s180] sm:$0xff]
        %v211 = vld [vmem:[%s180 + $0x8] sm:$0xff]
        %v212 = vld [vmem:[%s180 + $0x10] sm:$0xff]
        %v213 = vld [vmem:[%s180 + $0x18] sm:$0xff]
        %v214 = vld [vmem:[%s180 + $0x20] sm:$0xff]
        %v215 = vld [vmem:[%s180 + $0x28] sm:$0xff]
        %v216 = vld [vmem:[%s180 + $0x30] sm:$0xff]
        %v217 = vld [vmem:[%s180 + $0x38] sm:$0xff]
        %v218 = vld [vmem:[#allocation5] sm:$0xff]
        %v219 = vld [vmem:[#allocation5 + $0x8] sm:$0xff]
        %v220 = vld [vmem:[#allocation5 + $0x10] sm:$0xff]
        %v221 = vld [vmem:[#allocation5 + $0x18] sm:$0xff]
        %v222 = vld [vmem:[#allocation5 + $0x20] sm:$0xff]
        %v223 = vld [vmem:[#allocation5 + $0x28] sm:$0xff]
        %v224 = vld [vmem:[#allocation5 + $0x30] sm:$0xff]
        %v225 = vld [vmem:[#allocation5 + $0x38] sm:$0xff]
        %v226 = vadd.f32 %v210, %v218
        %v227 = vadd.f32 %v211, %v219
        %v228 = vadd.f32 %v212, %v220
        %v229 = vadd.f32 %v213, %v221
        %v230 = vadd.f32 %v214, %v222
        %v231 = vadd.f32 %v215, %v223
        %v232 = vadd.f32 %v216, %v224
        %v233 = vadd.f32 %v217, %v225
        %234 = vst [vmem:[%s206] sm:$0xff] %v226
        %235 = vst [vmem:[%s206 + $0x8] sm:$0xff] %v227
        %236 = vst [vmem:[%s206 + $0x10] sm:$0xff] %v228
        %237 = vst [vmem:[%s206 + $0x18] sm:$0xff] %v229
        %238 = vst [vmem:[%s206 + $0x20] sm:$0xff] %v230
        %239 = vst [vmem:[%s206 + $0x28] sm:$0xff] %v231
        %240 = vst [vmem:[%s206 + $0x30] sm:$0xff] %v232
        %241 = vst [vmem:[%s206 + $0x38] sm:$0xff] %v233
        %s242 = sand.u32 %s96, 1
        %s243 = scalar_lea.sflag [#allocation4], %s242
        %s244 = sand.u32 %s96, 1
        %s245 = smul.addr %s244, 64
        %s246 = scalar_lea.vmem [#allocation7], %s245
        // Predicated region
        $region37: #{tpu_custom_call.1} parent=27 // pred_check
          %p247 = pneg %p106
        $region38: #{tpu_custom_call.1} parent=27 // pred_check_branch
          %249 = sbr.rel (%p247) target = $region40
        $region39: #{tpu_custom_call.1} parent=27 // pred_region
          %s250 = smul.u32 8, %s24
          %252 = vsyncadd %s243, 0
          %s253 = smul.addr %s25, 8
          %s254 = sadd.s32 %s250, %s253
          %s255 = smul.addr %s254, 8
          %s256 = scalar_lea.hbm %s2, %s255
          %s257 = sshll.u32 %s246, 4
          %s258 = int_to_ptr.vmem [resolvable:$true] %s257
          %s259 = sshll.u32 %s256, 4
          %s260 = int_to_ptr.hbm [resolvable:$true] %s259
          %265 = dma.vmem_to_hbm [thread:$0]  %s258, 1024, %s260, %s243, 128, 128, 8
        $region40: #{tpu_custom_call.1} parent=27 // pred_fallthru
          _
      $region28: #{tpu_custom_call.1} parent=5 // pred_fallthru
        _
      %p266 = scmp.le.s32.totalorder 2, %s15
      // Predicated region
      $region41: #{tpu_custom_call.1} parent=5 // pred_check
        %p267 = pneg %p266
      $region42: #{tpu_custom_call.1} parent=5 // pred_check_branch
        %269 = sbr.rel (%p267) target = $region44
      $region43: #{tpu_custom_call.1} parent=5 // pred_region
        %s270 = ssub.s32 %s15, 2
        // Predicated region
        $region45: #{tpu_custom_call.1} parent=43 // pred_check
          %p271 = pneg %p112
        $region46: #{tpu_custom_call.1} parent=43 // pred_check_branch
          %273 = sbr.rel (%p271) target = $region48
        $region47: #{tpu_custom_call.1} parent=43 // pred_region
          %s274 = sand.u32 %s97, 1
          %s275 = scalar_lea.sflag [#allocation4], %s274
          %s276 = sand.u32 %s97, 1
          %s277 = smul.addr %s276, 64
          %s278 = scalar_lea.vmem [#allocation7], %s277
          %280 = dma.done %s275, 1024
        $region48: #{tpu_custom_call.1} parent=43 // pred_fallthru
          _
      $region44: #{tpu_custom_call.1} parent=5 // pred_fallthru
        _
    $region6: #{tpu_custom_call.1} parent=1 // loop_footer
      %s19 = sadd.s32 1, %s15
    $region7: #{tpu_custom_call.1} parent=1 // loop_footer_branch
      %14 = sbr.rel target = $region3
    $region8: #{tpu_custom_call.1} parent=1 // loop_exit
      _
    %281 = vsyncpa [#allocation3], 1
    %s282 = scalar_lea.sflag [#allocation3], 1
    %283 = vsyncpa %s282, 1
    %284 = vsyncpa [#allocation6], 1
    %285 = vsyncpa [#allocation4], 1
    %s286 = scalar_lea.sflag [#allocation4], 1
    %287 = vsyncpa %s286, 1

</llo_original>
